<compile_context>
chip_gen: v7x
topology: tpu7x:2x2x1
jax: 0.10.0
libtpu: 0.0.40
codegen_flags: <defaults>
</compile_context>

<pallas_src>
import math

import jax
import jax.numpy as jnp
from jax.experimental import pallas as pl
from jax.experimental.pallas import tpu as pltpu


def _round_up(n, m):
    return ((n + m - 1) // m) * m


def actor_kernel(x_ref, w1_ref, b1_ref, w2_ref, b2_ref, w3_ref, b3_ref,
                 means_ref):
    # hidden layer 1: (TB, D) @ (D, 64) + (1, 64) -> tanh  (f32 accumulate)
    h1 = jnp.tanh(
        jnp.dot(x_ref[...], w1_ref[...], preferred_element_type=jnp.float32)
        + b1_ref[...]
    )
    # hidden layer 2: (TB, 64) @ (64, 64) + (1, 64) -> tanh
    h2 = jnp.tanh(
        jnp.dot(h1, w2_ref[...], preferred_element_type=jnp.float32)
        + b2_ref[...]
    )
    # output layer: (TB, 64) @ (64, A) + (1, A)
    means = (
        jnp.dot(h2, w3_ref[...], preferred_element_type=jnp.float32)
        + b3_ref[...]
    )
    means_ref[...] = means.astype(means_ref.dtype)


def prepare_actor_params(params):
    """One-time parameter preprocessing (hoisted out of the rollout hot loop)."""
    w1, b1, w2, b2, w3, b3, logstds = params
    H = w1.shape[1]
    A = w3.shape[1]
    b1_2d = b1.reshape(1, H)
    b2_2d = b2.reshape(1, H)
    b3_2d = b3.reshape(1, A)
    stds = jnp.clip(jnp.exp(logstds), 0.001, 50.0)   # (A,), x-independent
    return (w1, b1_2d, w2, b2_2d, w3, b3_2d, stds)


def actor_forward(x, prepared_params, *, batch_tile=4096):
    """Actor MLP forward pass.

    Returns (means, stds) of Normal(means, stds); means is (B, A), stds is the
    (A,) clipped vector (broadcast lazily by the distribution consumer).
    """
    w1, b1, w2, b2, w3, b3, stds = prepared_params
    B, D = x.shape
    H = w1.shape[1]
    A = w3.shape[1]

    SUBLANES = 8

    # Batch tile: multiple of 8 sublanes, <= batch_tile, and capped at
    # ceil(B/2) so there are >= 2 grid steps whenever B > 8 (lets the
    # "parallel" grid axis shard across v7x's two TensorCores).  No padding
    # of x: Pallas masks the ragged final tile (garbage rows in, discarded
    # rows out; each output row depends only on its own input row).
    TB = max(SUBLANES, min(batch_tile, _round_up(pl.cdiv(B, 2), SUBLANES)))
    num_tiles = pl.cdiv(B, TB)

    # x / means stream per grid step; weights & biases stay VMEM-resident
    # (their block index never changes, so they are DMA'd once).
    x_spec = pl.BlockSpec((TB, D), lambda i: (i, 0))
    resident = lambda shape: pl.BlockSpec(shape, lambda i: (0, 0))
    out_spec = pl.BlockSpec((TB, A), lambda i: (i, 0))

    cost = pl.CostEstimate(
        flops=2 * B * (D * H + H * H + H * A),
        transcendentals=2 * B * H,
        bytes_accessed=4 * (B * D + B * A + D * H + H * H + H * A + 2 * H + A),
    )

    means = pl.pallas_call(
        actor_kernel,
        out_shape=jax.ShapeDtypeStruct((B, A), jnp.float32),
        grid=(num_tiles,),
        in_specs=[
            x_spec,
            resident((D, H)), resident((1, H)),
            resident((H, H)), resident((1, H)),
            resident((H, A)), resident((1, A)),
        ],
        out_specs=out_spec,
        cost_estimate=cost,
        compiler_params=pltpu.CompilerParams(
            dimension_semantics=("parallel",)),
    )(x, w1, b1, w2, b2, w3, b3)

    return means, stds


def init_actor_params(key, state_dim, n_actions, hidden=64):
    """Deterministic init matching nn.Linear's U(-1/sqrt(fan_in), 1/sqrt(fan_in))."""
    ks = jax.random.split(key, 6)

    def linear(kw, kb, fan_in, fan_out):
        bound = 1.0 / math.sqrt(fan_in)
        w = jax.random.uniform(kw, (fan_in, fan_out), jnp.float32, -bound, bound)
        b = jax.random.uniform(kb, (fan_out,), jnp.float32, -bound, bound)
        return w, b

    w1, b1 = linear(ks[0], ks[1], state_dim, hidden)
    w2, b2 = linear(ks[2], ks[3], hidden, hidden)
    w3, b3 = linear(ks[4], ks[5], hidden, n_actions)
    logstds = jnp.full((n_actions,), 0.1, dtype=jnp.float32)
    return (w1, b1, w2, b2, w3, b3, logstds)


def actor_forward_ref(x, params):
    """Pure-JAX reference for correctness checking."""
    w1, b1, w2, b2, w3, b3, logstds = params
    h1 = jnp.tanh(x @ w1 + b1)
    h2 = jnp.tanh(h1 @ w2 + b2)
    means = h2 @ w3 + b3
    stds = jnp.clip(jnp.exp(logstds), 0.001, 50.0)   # (A,) vector
    return means, stds


if __name__ == "__main__":
    key = jax.random.PRNGKey(0)
    k_param, k_x1, k_x2 = jax.random.split(key, 3)

    state_dim = 8
    n_actions = 4
    raw_params = init_actor_params(k_param, state_dim, n_actions)
    prepared = prepare_actor_params(raw_params)   # one-time prep, outside hot loop

    # small batch (block bigger than the array -> boundary-masked tile)
    batch = 2
    x = jax.random.normal(k_x1, (batch, state_dim), dtype=jnp.float32)
    means, stds = actor_forward(x, prepared)
    jax.block_until_ready((means, stds))
    means_ref, stds_ref = actor_forward_ref(x, raw_params)
    assert means.shape == (batch, n_actions)
    assert stds.shape == (n_actions,)
    assert jnp.allclose(means, means_ref, atol=1e-4, rtol=1e-4)
    assert jnp.allclose(stds, stds_ref, atol=1e-6, rtol=1e-6)

    # larger, non-tile-aligned batch (multi-step grid + ragged final tile)
    batch2 = 300
    x2 = jax.random.normal(k_x2, (batch2, state_dim), dtype=jnp.float32)
    means2, stds2 = actor_forward(x2, prepared, batch_tile=128)
    jax.block_until_ready((means2, stds2))
    means2_ref, stds2_ref = actor_forward_ref(x2, raw_params)
    assert means2.shape == (batch2, n_actions)
    assert jnp.allclose(means2, means2_ref, atol=1e-4, rtol=1e-4)
    assert jnp.allclose(stds2, stds2_ref, atol=1e-6, rtol=1e-6)

    print("KERNEL_OK")
</pallas_src>

<mosaic_0001>
module attributes {stable_mosaic.version = 11 : i64} {
  func.func @actor_kernel(%arg0: i32, %arg1: memref<8x8xf32, #tpu.memory_space<vmem>>, %arg2: memref<8x64xf32, #tpu.memory_space<vmem>>, %arg3: memref<1x64xf32, #tpu.memory_space<vmem>>, %arg4: memref<64x64xf32, #tpu.memory_space<vmem>>, %arg5: memref<1x64xf32, #tpu.memory_space<vmem>>, %arg6: memref<64x4xf32, #tpu.memory_space<vmem>>, %arg7: memref<1x4xf32, #tpu.memory_space<vmem>>, %arg8: memref<8x4xf32, #tpu.memory_space<vmem>>) attributes {dimension_semantics = [#tpu.dimension_semantics<parallel>], iteration_bounds = array<i64: 1>, scalar_prefetch = 0 : i64, scratch_operands = 0 : i64, tpu.core_type = #tpu.core_type<tc>, window_params = [{transform_indices = @transform_0, window_bounds = array<i64: 8, 8>}, {pipeline_mode = #tpu.pipeline_mode<synchronous>, transform_indices = @transform_1, window_bounds = array<i64: 8, 64>}, {pipeline_mode = #tpu.pipeline_mode<synchronous>, transform_indices = @transform_2, window_bounds = array<i64: 1, 64>}, {pipeline_mode = #tpu.pipeline_mode<synchronous>, transform_indices = @transform_3, window_bounds = array<i64: 64, 64>}, {pipeline_mode = #tpu.pipeline_mode<synchronous>, transform_indices = @transform_4, window_bounds = array<i64: 1, 64>}, {pipeline_mode = #tpu.pipeline_mode<synchronous>, transform_indices = @transform_5, window_bounds = array<i64: 64, 4>}, {pipeline_mode = #tpu.pipeline_mode<synchronous>, transform_indices = @transform_6, window_bounds = array<i64: 1, 4>}, {transform_indices = @transform_7, window_bounds = array<i64: 8, 4>}]} {
    %c0 = arith.constant 0 : index
    %c0_0 = arith.constant 0 : index
    %0 = vector.load %arg1[%c0, %c0_0] : memref<8x8xf32, #tpu.memory_space<vmem>>, vector<8x8xf32>
    %c0_1 = arith.constant 0 : index
    %c0_2 = arith.constant 0 : index
    %1 = vector.load %arg2[%c0_1, %c0_2] : memref<8x64xf32, #tpu.memory_space<vmem>>, vector<8x64xf32>
    %cst = arith.constant dense<0.000000e+00> : vector<8x64xf32>
    %2 = tpu.matmul %0, %1, %cst {dimension_numbers = #tpu.dot_dimension_numbers<[1], [0], [0], [1], [0, 0, 1, 1], [], []>} : vector<8x8xf32>, vector<8x64xf32>, vector<8x64xf32> -> vector<8x64xf32>
    %c0_3 = arith.constant 0 : index
    %c0_4 = arith.constant 0 : index
    %3 = vector.load %arg3[%c0_3, %c0_4] : memref<1x64xf32, #tpu.memory_space<vmem>>, vector<1x64xf32>
    %4 = vector.broadcast %3 : vector<1x64xf32> to vector<8x64xf32>
    %5 = arith.addf %2, %4 : vector<8x64xf32>
    %6 = math.tanh %5 : vector<8x64xf32>
    %c0_5 = arith.constant 0 : index
    %c0_6 = arith.constant 0 : index
    %7 = vector.load %arg4[%c0_5, %c0_6] : memref<64x64xf32, #tpu.memory_space<vmem>>, vector<64x64xf32>
    %cst_7 = arith.constant dense<0.000000e+00> : vector<8x64xf32>
    %8 = tpu.matmul %6, %7, %cst_7 {dimension_numbers = #tpu.dot_dimension_numbers<[1], [0], [0], [1], [0, 0, 1, 1], [], []>} : vector<8x64xf32>, vector<64x64xf32>, vector<8x64xf32> -> vector<8x64xf32>
    %c0_8 = arith.constant 0 : index
    %c0_9 = arith.constant 0 : index
    %9 = vector.load %arg5[%c0_8, %c0_9] : memref<1x64xf32, #tpu.memory_space<vmem>>, vector<1x64xf32>
    %10 = vector.broadcast %9 : vector<1x64xf32> to vector<8x64xf32>
    %11 = arith.addf %8, %10 : vector<8x64xf32>
    %12 = math.tanh %11 : vector<8x64xf32>
    %c0_10 = arith.constant 0 : index
    %c0_11 = arith.constant 0 : index
    %13 = vector.load %arg6[%c0_10, %c0_11] : memref<64x4xf32, #tpu.memory_space<vmem>>, vector<64x4xf32>
    %cst_12 = arith.constant dense<0.000000e+00> : vector<8x4xf32>
    %14 = tpu.matmul %12, %13, %cst_12 {dimension_numbers = #tpu.dot_dimension_numbers<[1], [0], [0], [1], [0, 0, 1, 1], [], []>} : vector<8x64xf32>, vector<64x4xf32>, vector<8x4xf32> -> vector<8x4xf32>
    %c0_13 = arith.constant 0 : index
    %c0_14 = arith.constant 0 : index
    %15 = vector.load %arg7[%c0_13, %c0_14] : memref<1x4xf32, #tpu.memory_space<vmem>>, vector<1x4xf32>
    %16 = vector.broadcast %15 : vector<1x4xf32> to vector<8x4xf32>
    %17 = arith.addf %14, %16 : vector<8x4xf32>
    %c0_15 = arith.constant 0 : index
    %c0_16 = arith.constant 0 : index
    %18 = vector.load %arg8[%c0_15, %c0_16] : memref<8x4xf32, #tpu.memory_space<vmem>>, vector<8x4xf32>
    tpu.vector_store %arg8[%c0_15, %c0_16], %17 {strides = array<i32>} : memref<8x4xf32, #tpu.memory_space<vmem>>, vector<8x4xf32>,
    return
  }
  func.func @transform_0(%arg0: i32) -> (i32, i32) {
    %c0_i32 = arith.constant 0 : i32
    %c0_i32_0 = arith.constant 0 : i32
    return %arg0, %c0_i32 : i32, i32
  }
  func.func @transform_1(%arg0: i32) -> (i32, i32) {
    %c0_i32 = arith.constant 0 : i32
    %c0_i32_0 = arith.constant 0 : i32
    %c0_i32_1 = arith.constant 0 : i32
    return %c0_i32, %c0_i32_0 : i32, i32
  }
  func.func @transform_2(%arg0: i32) -> (i32, i32) {
    %c0_i32 = arith.constant 0 : i32
    %c0_i32_0 = arith.constant 0 : i32
    %c0_i32_1 = arith.constant 0 : i32
    return %c0_i32, %c0_i32_0 : i32, i32
  }
  func.func @transform_3(%arg0: i32) -> (i32, i32) {
    %c0_i32 = arith.constant 0 : i32
    %c0_i32_0 = arith.constant 0 : i32
    %c0_i32_1 = arith.constant 0 : i32
    return %c0_i32, %c0_i32_0 : i32, i32
  }
  func.func @transform_4(%arg0: i32) -> (i32, i32) {
    %c0_i32 = arith.constant 0 : i32
    %c0_i32_0 = arith.constant 0 : i32
    %c0_i32_1 = arith.constant 0 : i32
    return %c0_i32, %c0_i32_0 : i32, i32
  }
  func.func @transform_5(%arg0: i32) -> (i32, i32) {
    %c0_i32 = arith.constant 0 : i32
    %c0_i32_0 = arith.constant 0 : i32
    %c0_i32_1 = arith.constant 0 : i32
    return %c0_i32, %c0_i32_0 : i32, i32
  }
  func.func @transform_6(%arg0: i32) -> (i32, i32) {
    %c0_i32 = arith.constant 0 : i32
    %c0_i32_0 = arith.constant 0 : i32
    %c0_i32_1 = arith.constant 0 : i32
    return %c0_i32, %c0_i32_0 : i32, i32
  }
  func.func @transform_7(%arg0: i32) -> (i32, i32) {
    %c0_i32 = arith.constant 0 : i32
    %c0_i32_0 = arith.constant 0 : i32
    return %arg0, %c0_i32 : i32, i32
  }
}

</mosaic_0001>

<llo_original>
// kernel: tpu_custom_call.1
$region0: #{tpu_custom_call.1}
  #allocation0 [shape = 'u32[]', space=smem, size = 0x4, offset = 0x4, fixed_abs, tag = 'smem constant byte address 0x4 - core index']
  #allocation1 [shape = 'u32[144,128]{1,0:T(1,128)}', space=vmem, size = 0x12000, scoped, tag = 'internal scratch']
  %s0 = inlined_call_operand.vmem [shape: f32[2,8], index: 0, kind: input, shape index: {}]
  %s1 = inlined_call_operand.vmem [shape: f32[8,64], index: 1, kind: input, shape index: {}]
  %s2 = inlined_call_operand.vmem [shape: f32[1,64], index: 2, kind: input, shape index: {}]
  %s3 = inlined_call_operand.vmem [shape: f32[64,64], index: 3, kind: input, shape index: {}]
  %s4 = inlined_call_operand.vmem [shape: f32[1,64], index: 4, kind: input, shape index: {}]
  %s5 = inlined_call_operand.vmem [shape: f32[64,4], index: 5, kind: input, shape index: {}]
  %s6 = inlined_call_operand.vmem [shape: f32[1,4], index: 6, kind: input, shape index: {}]
  %s7 = inlined_call_operand.hbm [shape: f32[2,4], index: 7, kind: output, shape index: {}]
  %s8 = sld [smem:[#allocation0]]
  $region38: #{tpu_custom_call.1} parent=0
    _
  %s10 = ssub.s32 1, %s8
  %s11 = scalar_select 0, %s10, %s8
  $region1: #{tpu_custom_call.1} parent=0
    #allocation2 [shape = 'u8[4096]{0}', space=vmem, size = 0x1000, scoped, tag = 'output window, operand 0, single buffered']
    #allocation3 [shape = 's32[1]{0}', space=sflag, size = 0x4, scoped, tag = 'scoped memory for tpu_custom_call.1']
    %12 = vsyncpa [#allocation3], 0
    // Predicated region
    $region2: #{tpu_custom_call.1} parent=1 // pred_check
      _
    $region3: #{tpu_custom_call.1} parent=1 // pred_check_branch
      %14 = sbr.rel (0) target = $region5
    $region4: #{tpu_custom_call.1} parent=1 // pred_region
      _
    $region5: #{tpu_custom_call.1} parent=1 // pred_fallthru
      _
    // Predicated region
    $region6: #{tpu_custom_call.1} parent=1 // pred_check
      _
    $region7: #{tpu_custom_call.1} parent=1 // pred_check_branch
      %16 = sbr.rel (0) target = $region9
    $region8: #{tpu_custom_call.1} parent=1 // pred_region
      _
    $region9: #{tpu_custom_call.1} parent=1 // pred_fallthru
      _
    // Predicated region
    $region10: #{tpu_custom_call.1} parent=1 // pred_check
      _
    $region11: #{tpu_custom_call.1} parent=1 // pred_check_branch
      %18 = sbr.rel (0) target = $region13
    $region12: #{tpu_custom_call.1} parent=1 // pred_region
      _
    $region13: #{tpu_custom_call.1} parent=1 // pred_fallthru
      _
    // Predicated region
    $region14: #{tpu_custom_call.1} parent=1 // pred_check
      _
    $region15: #{tpu_custom_call.1} parent=1 // pred_check_branch
      %20 = sbr.rel (0) target = $region17
    $region16: #{tpu_custom_call.1} parent=1 // pred_region
      _
    $region17: #{tpu_custom_call.1} parent=1 // pred_fallthru
      _
    // Predicated region
    $region18: #{tpu_custom_call.1} parent=1 // pred_check
      _
    $region19: #{tpu_custom_call.1} parent=1 // pred_check_branch
      %22 = sbr.rel (0) target = $region21
    $region20: #{tpu_custom_call.1} parent=1 // pred_region
      _
    $region21: #{tpu_custom_call.1} parent=1 // pred_fallthru
      _
    // Predicated region
    $region22: #{tpu_custom_call.1} parent=1 // pred_check
      _
    $region23: #{tpu_custom_call.1} parent=1 // pred_check_branch
      %24 = sbr.rel (0) target = $region25
    $region24: #{tpu_custom_call.1} parent=1 // pred_region
      _
    $region25: #{tpu_custom_call.1} parent=1 // pred_fallthru
      _
    // Predicated region
    $region26: #{tpu_custom_call.1} parent=1 // pred_check
      _
    $region27: #{tpu_custom_call.1} parent=1 // pred_check_branch
      %26 = sbr.rel (0) target = $region29
    $region28: #{tpu_custom_call.1} parent=1 // pred_region
      _
    $region29: #{tpu_custom_call.1} parent=1 // pred_fallthru
      _
    %v27 = vld [vmem:[%s0] sm:$0xff]
    %v28 = vld [vmem:[%s1] sm:$0xff]
    %v29 = vld [vmem:[%s2] sm:$0x1]
    %v31 = vlaneseq
    %v32 = vshrl.u32 %v31, 7
    %v33 = vsub.s32 0, %v32
    %v34 = vrot.slane %v29, %v33
    %vm36 = vcmask 64512
    %v38 = vsel %vm36, %v27, 0
    %40 = vmatprep.subr.mxu0 0.0
    %41 = vmatpush1.msra.mxu0 %v28
    %42 = vmatprep.subr.mxu0 0.0
    %43 = vmatpush1.msra.mxu0 0.0
    %44 = vmatprep.subr.mxu0 0.0
    %45 = vmatpush1.msra.mxu0 0.0
    %46 = vmatprep.subr.mxu0 0.0
    %47 = vmatpush1.msra.mxu0 0.0
    %48 = vmatprep.subr.mxu0 0.0
    %49 = vmatpush1.msra.mxu0 0.0
    %50 = vmatprep.subr.mxu0 0.0
    %51 = vmatpush1.msra.mxu0 0.0
    %52 = vmatprep.subr.mxu0 0.0
    %53 = vmatpush1.msra.mxu0 0.0
    %54 = vmatprep.subr.mxu0 0.0
    %55 = vmatpush1.msra.mxu0 0.0
    %56 = vmatprep.subr.mxu0 0.0
    %57 = vmatpush1.msra.mxu0 0.0
    %58 = vmatprep.subr.mxu0 0.0
    %59 = vmatpush1.msra.mxu0 0.0
    %60 = vmatprep.subr.mxu0 0.0
    %61 = vmatpush1.msra.mxu0 0.0
    %62 = vmatprep.subr.mxu0 0.0
    %63 = vmatpush1.msra.mxu0 0.0
    %64 = vmatprep.subr.mxu0 0.0
    %65 = vmatpush1.msra.mxu0 0.0
    %66 = vmatprep.subr.mxu0 0.0
    %67 = vmatpush1.msra.mxu0 0.0
    %68 = vmatprep.subr.mxu0 0.0
    %69 = vmatpush1.msra.mxu0 0.0
    %70 = vmatprep.subr.mxu0 0.0
    %71 = vmatpush1.msra.mxu0 0.0
    %72 = vmatprep.subr.mxu0 0.0
    %73 = vmatpush1.msra.mxu0 0.0
    %74 = vmatprep.subr.mxu0 0.0
    %75 = vmatpush1.msra.mxu0 0.0
    %76 = vmatprep.subr.mxu0 0.0
    %77 = vmatpush1.msra.mxu0 0.0
    %78 = vmatprep.subr.mxu0 0.0
    %79 = vmatpush1.msra.mxu0 0.0
    %80 = vmatprep.subr.mxu0 0.0
    %81 = vmatpush1.msra.mxu0 0.0
    %82 = vmatprep.subr.mxu0 0.0
    %83 = vmatpush1.msra.mxu0 0.0
    %84 = vmatprep.subr.mxu0 0.0
    %85 = vmatpush1.msra.mxu0 0.0
    %86 = vmatprep.subr.mxu0 0.0
    %87 = vmatpush1.msra.mxu0 0.0
    %88 = vmatprep.subr.mxu0 0.0
    %89 = vmatpush1.msra.mxu0 0.0
    %90 = vmatprep.subr.mxu0 0.0
    %91 = vmatpush1.msra.mxu0 0.0
    %92 = vmatprep.subr.mxu0 0.0
    %93 = vmatpush1.msra.mxu0 0.0
    %94 = vmatprep.subr.mxu0 0.0
    %95 = vmatpush1.msra.mxu0 0.0
    %96 = vmatprep.subr.mxu0 0.0
    %97 = vmatpush1.msra.mxu0 0.0
    %98 = vmatprep.subr.mxu0 0.0
    %99 = vmatpush1.msra.mxu0 0.0
    %100 = vmatprep.subr.mxu0 0.0
    %101 = vmatpush1.msra.mxu0 0.0
    %102 = vmatprep.subr.mxu0 0.0
    %103 = vmatpush1.msra.mxu0 0.0
    %104 = vmatprep.mubr.f32.mxu0 0.0
    %105 = vmatmul.mubr.f32.gmra.mrb[0].mxu0 %v38
    %v106 = vpop.f32.mrb[0].mxu0
    %v107 = vadd.f32 %v34, %v106
    %v108 = vpop.f32.mrb[0].mxu0
    %109 = vdwg.mxu0
    %v110 = vtanh.pop %v107
    %v111 = vld [vmem:[%s3] sm:$0xff]
    %v112 = vld [vmem:[%s3 + $0x8] sm:$0xff]
    %v113 = vld [vmem:[%s3 + $0x10] sm:$0xff]
    %v114 = vld [vmem:[%s3 + $0x18] sm:$0xff]
    %v115 = vld [vmem:[%s3 + $0x20] sm:$0xff]
    %v116 = vld [vmem:[%s3 + $0x28] sm:$0xff]
    %v117 = vld [vmem:[%s3 + $0x30] sm:$0xff]
    %v118 = vld [vmem:[%s3 + $0x38] sm:$0xff]
    %v119 = vld [vmem:[%s4] sm:$0x1]
    %v121 = vlaneseq
    %v122 = vshrl.u32 %v121, 7
    %v123 = vsub.s32 0, %v122
    %v124 = vrot.slane %v119, %v123
    %vm126 = vcmask 523264
    %v128 = vsel %vm126, %v110, 0
    %130 = vmatprep.subr.mxu0 0.0
    %131 = vmatpush1.msra.mxu0 %v111
    %132 = vmatprep.subr.mxu0 0.0
    %133 = vmatpush1.msra.mxu0 %v112
    %134 = vmatprep.subr.mxu0 0.0
    %135 = vmatpush1.msra.mxu0 %v113
    %136 = vmatprep.subr.mxu0 0.0
    %137 = vmatpush1.msra.mxu0 %v114
    %138 = vmatprep.subr.mxu0 0.0
    %139 = vmatpush1.msra.mxu0 %v115
    %140 = vmatprep.subr.mxu0 0.0
    %141 = vmatpush1.msra.mxu0 %v116
    %142 = vmatprep.subr.mxu0 0.0
    %143 = vmatpush1.msra.mxu0 %v117
    %144 = vmatprep.subr.mxu0 0.0
    %145 = vmatpush1.msra.mxu0 %v118
    %146 = vmatprep.subr.mxu0 0.0
    %147 = vmatpush1.msra.mxu0 0.0
    %148 = vmatprep.subr.mxu0 0.0
    %149 = vmatpush1.msra.mxu0 0.0
    %150 = vmatprep.subr.mxu0 0.0
    %151 = vmatpush1.msra.mxu0 0.0
    %152 = vmatprep.subr.mxu0 0.0
    %153 = vmatpush1.msra.mxu0 0.0
    %154 = vmatprep.subr.mxu0 0.0
    %155 = vmatpush1.msra.mxu0 0.0
    %156 = vmatprep.subr.mxu0 0.0
    %157 = vmatpush1.msra.mxu0 0.0
    %158 = vmatprep.subr.mxu0 0.0
    %159 = vmatpush1.msra.mxu0 0.0
    %160 = vmatprep.subr.mxu0 0.0
    %161 = vmatpush1.msra.mxu0 0.0
    %162 = vmatprep.subr.mxu0 0.0
    %163 = vmatpush1.msra.mxu0 0.0
    %164 = vmatprep.subr.mxu0 0.0
    %165 = vmatpush1.msra.mxu0 0.0
    %166 = vmatprep.subr.mxu0 0.0
    %167 = vmatpush1.msra.mxu0 0.0
    %168 = vmatprep.subr.mxu0 0.0
    %169 = vmatpush1.msra.mxu0 0.0
    %170 = vmatprep.subr.mxu0 0.0
    %171 = vmatpush1.msra.mxu0 0.0
    %172 = vmatprep.subr.mxu0 0.0
    %173 = vmatpush1.msra.mxu0 0.0
    %174 = vmatprep.subr.mxu0 0.0
    %175 = vmatpush1.msra.mxu0 0.0
    %176 = vmatprep.subr.mxu0 0.0
    %177 = vmatpush1.msra.mxu0 0.0
    %178 = vmatprep.subr.mxu0 0.0
    %179 = vmatpush1.msra.mxu0 0.0
    %180 = vmatprep.subr.mxu0 0.0
    %181 = vmatpush1.msra.mxu0 0.0
    %182 = vmatprep.subr.mxu0 0.0
    %183 = vmatpush1.msra.mxu0 0.0
    %184 = vmatprep.subr.mxu0 0.0
    %185 = vmatpush1.msra.mxu0 0.0
    %186 = vmatprep.subr.mxu0 0.0
    %187 = vmatpush1.msra.mxu0 0.0
    %188 = vmatprep.subr.mxu0 0.0
    %189 = vmatpush1.msra.mxu0 0.0
    %190 = vmatprep.subr.mxu0 0.0
    %191 = vmatpush1.msra.mxu0 0.0
    %192 = vmatprep.subr.mxu0 0.0
    %193 = vmatpush1.msra.mxu0 0.0
    %194 = vmatprep.mubr.f32.mxu0 0.0
    %195 = vmatmul.mubr.f32.gmra.mrb[0].mxu0 %v128
    %v196 = vpop.f32.mrb[0].mxu0
    %v197 = vadd.f32 %v124, %v196
    %v198 = vpop.f32.mrb[0].mxu0
    %199 = vdwg.mxu0
    %v200 = vtanh.pop %v197
    %v201 = vld [vmem:[%s5] sm:$0xff]
    %v202 = vld [vmem:[%s5 + $0x8] sm:$0xff]
    %v203 = vld [vmem:[%s5 + $0x10] sm:$0xff]
    %v204 = vld [vmem:[%s5 + $0x18] sm:$0xff]
    %v205 = vld [vmem:[%s5 + $0x20] sm:$0xff]
    %v206 = vld [vmem:[%s5 + $0x28] sm:$0xff]
    %v207 = vld [vmem:[%s5 + $0x30] sm:$0xff]
    %v208 = vld [vmem:[%s5 + $0x38] sm:$0xff]
    %v209 = vld [vmem:[%s6] sm:$0x1]
    %v211 = vlaneseq
    %v212 = vshrl.u32 %v211, 7
    %v213 = vsub.s32 0, %v212
    %v214 = vrot.slane %v209, %v213
    %v217 = vsel %vm126, %v200, 0
    %219 = vmatprep.subr.mxu0 0.0
    %220 = vmatpush1.msra.mxu0 %v201
    %221 = vmatprep.subr.mxu0 0.0
    %222 = vmatpush1.msra.mxu0 %v202
    %223 = vmatprep.subr.mxu0 0.0
    %224 = vmatpush1.msra.mxu0 %v203
    %225 = vmatprep.subr.mxu0 0.0
    %226 = vmatpush1.msra.mxu0 %v204
    %227 = vmatprep.subr.mxu0 0.0
    %228 = vmatpush1.msra.mxu0 %v205
    %229 = vmatprep.subr.mxu0 0.0
    %230 = vmatpush1.msra.mxu0 %v206
    %231 = vmatprep.subr.mxu0 0.0
    %232 = vmatpush1.msra.mxu0 %v207
    %233 = vmatprep.subr.mxu0 0.0
    %234 = vmatpush1.msra.mxu0 %v208
    %235 = vmatprep.subr.mxu0 0.0
    %236 = vmatpush1.msra.mxu0 0.0
    %237 = vmatprep.subr.mxu0 0.0
    %238 = vmatpush1.msra.mxu0 0.0
    %239 = vmatprep.subr.mxu0 0.0
    %240 = vmatpush1.msra.mxu0 0.0
    %241 = vmatprep.subr.mxu0 0.0
    %242 = vmatpush1.msra.mxu0 0.0
    %243 = vmatprep.subr.mxu0 0.0
    %244 = vmatpush1.msra.mxu0 0.0
    %245 = vmatprep.subr.mxu0 0.0
    %246 = vmatpush1.msra.mxu0 0.0
    %247 = vmatprep.subr.mxu0 0.0
    %248 = vmatpush1.msra.mxu0 0.0
    %249 = vmatprep.subr.mxu0 0.0
    %250 = vmatpush1.msra.mxu0 0.0
    %251 = vmatprep.subr.mxu0 0.0
    %252 = vmatpush1.msra.mxu0 0.0
    %253 = vmatprep.subr.mxu0 0.0
    %254 = vmatpush1.msra.mxu0 0.0
    %255 = vmatprep.subr.mxu0 0.0
    %256 = vmatpush1.msra.mxu0 0.0
    %257 = vmatprep.subr.mxu0 0.0
    %258 = vmatpush1.msra.mxu0 0.0
    %259 = vmatprep.subr.mxu0 0.0
    %260 = vmatpush1.msra.mxu0 0.0
    %261 = vmatprep.subr.mxu0 0.0
    %262 = vmatpush1.msra.mxu0 0.0
    %263 = vmatprep.subr.mxu0 0.0
    %264 = vmatpush1.msra.mxu0 0.0
    %265 = vmatprep.subr.mxu0 0.0
    %266 = vmatpush1.msra.mxu0 0.0
    %267 = vmatprep.subr.mxu0 0.0
    %268 = vmatpush1.msra.mxu0 0.0
    %269 = vmatprep.subr.mxu0 0.0
    %270 = vmatpush1.msra.mxu0 0.0
    %271 = vmatprep.subr.mxu0 0.0
    %272 = vmatpush1.msra.mxu0 0.0
    %273 = vmatprep.subr.mxu0 0.0
    %274 = vmatpush1.msra.mxu0 0.0
    %275 = vmatprep.subr.mxu0 0.0
    %276 = vmatpush1.msra.mxu0 0.0
    %277 = vmatprep.subr.mxu0 0.0
    %278 = vmatpush1.msra.mxu0 0.0
    %279 = vmatprep.subr.mxu0 0.0
    %280 = vmatpush1.msra.mxu0 0.0
    %281 = vmatprep.subr.mxu0 0.0
    %282 = vmatpush1.msra.mxu0 0.0
    %283 = vmatprep.mubr.f32.mxu0 0.0
    %284 = vmatmul.mubr.f32.gmra.mrb[0].mxu0 %v217
    %v285 = vpop.f32.mrb[0].mxu0
    %v286 = vadd.f32 %v214, %v285
    %v287 = vpop.f32.mrb[0].mxu0
    %288 = vdwg.mxu0
    %vm289 = vcmask 31744
    %290 = vst.msk [vmem:[#allocation2] sm:$0xff] %vm289, %v286
    // Predicated region
    $region30: #{tpu_custom_call.1} parent=1 // pred_check
      _
    $region31: #{tpu_custom_call.1} parent=1 // pred_check_branch
      %292 = sbr.rel (0) target = $region33
    $region32: #{tpu_custom_call.1} parent=1 // pred_region
      %s294 = ssub.s32 128, 32
      %295 = vsyncadd [#allocation3], %s294
      %s296 = sshll.u32 [#allocation2], 4
      %s297 = int_to_ptr.vmem [resolvable:$true] %s296
      %302 = dma.vmem_to_hbm [thread:$0]  %s297, 32, %s7, [#allocation3], 32, 32, 2
    $region33: #{tpu_custom_call.1} parent=1 // pred_fallthru
      _
    // Predicated region
    $region34: #{tpu_custom_call.1} parent=1 // pred_check
      _
    $region35: #{tpu_custom_call.1} parent=1 // pred_check_branch
      %304 = sbr.rel (0) target = $region37
    $region36: #{tpu_custom_call.1} parent=1 // pred_region
      %305 = dma.done [#allocation3], 128
    $region37: #{tpu_custom_call.1} parent=1 // pred_fallthru
      _
    %306 = vsyncpa [#allocation3], 1

</llo_original>
